<compile_context>
chip_gen: v6e
topology: v6e:2x2x1
jax: 0.10.0
libtpu: 0.0.40
codegen_flags: <defaults>
</compile_context>

<pallas_src>
import functools

import jax
import jax.numpy as jnp
from jax.experimental import pallas as pl
from jax.experimental.pallas import tpu as pltpu


NODE_FEAT_DIM = 12 * 14  # 168, module default
LN_EPS = 1e-5


def _round_up(x, m):
    return ((x + m - 1) // m) * m


def bindformer_kernel(wt_ref, mut_ref, w1_ref, w2_ref, vec_ref,
                      wt_out_ref, mut_out_ref, wtp_ref, mutp_ref,
                      *, d_valid, d_pad):
    # Widen the 168-lane activation tiles to 256 lanes inside VMEM with exact
    # zeros in the pad lanes.  Everything downstream (matmul contraction,
    # LayerNorm reductions) then runs on cleanly zero-padded 256-wide data.
    zeros = jnp.zeros(wtp_ref.shape, jnp.float32)
    wtp_ref[...] = zeros
    mutp_ref[...] = zeros
    wtp_ref[:, :d_valid] = wt_ref[...].astype(jnp.float32)
    mutp_ref[:, :d_valid] = mut_ref[...].astype(jnp.float32)
    wt = wtp_ref[...]                           # (T, DP) f32, pad lanes == 0
    mut = mutp_ref[...]                         # (T, DP) f32, pad lanes == 0

    w1 = w1_ref[...]                            # (DP, DP) bf16, resident
    w2 = w2_ref[...]                            # (DP, DP) bf16, resident

    vecs = vec_ref[...]                         # (4, DP) f32, resident
    b1 = vecs[0:1, :]
    b2 = vecs[1:2, :]
    gamma = vecs[2:3, :]
    beta = vecs[3:4, :]

    # lane-validity mask for the padded feature dimension (168 real lanes)
    lane = jax.lax.broadcasted_iota(jnp.int32, (1, d_pad), 1)
    valid = (lane < d_valid).astype(jnp.float32)
    inv_d = 1.0 / d_valid

    def res_mlp(x_bf16):
        # bf16 MXU inputs, f32 accumulation.  ReLU is fused with the bf16
        # downcast so only one f32 intermediate stays live between matmuls.
        h = jnp.dot(x_bf16, w1, preferred_element_type=jnp.float32) + b1
        h = jnp.maximum(h, 0.0).astype(jnp.bfloat16)
        return jnp.dot(h, w2, preferred_element_type=jnp.float32) + b2

    # cross-update (sequential: second MLP sees the *updated* wt).  Pad lanes
    # stay exactly zero throughout (zero weights / biases in the pad region).
    wt_new = wt + res_mlp((wt - mut).astype(jnp.bfloat16))
    mut_new = mut + res_mlp((mut - wt_new).astype(jnp.bfloat16))

    # TODO(synk): GEAEncoderResidue (self.res_gea_layer) has no definition in
    # the provided module source; it is skipped (identity) here.

    def layer_norm(x):
        # pad lanes of x are exactly zero, so a full-lane sum already equals
        # the valid-lane sum; normalize by the true feature count (168).
        mean = jnp.sum(x, axis=-1, keepdims=True) * inv_d
        diff = (x - mean) * valid               # zero out pad lanes again
        var = jnp.sum(diff * diff, axis=-1, keepdims=True) * inv_d
        return diff * jax.lax.rsqrt(var + LN_EPS) * gamma + beta

    # Store only the 168 real lanes -> no post-kernel slicing pass over HBM.
    wt_out_ref[...] = layer_norm(wt_new)[:, :d_valid].astype(wt_out_ref.dtype)
    mut_out_ref[...] = layer_norm(mut_new)[:, :d_valid].astype(mut_out_ref.dtype)


@functools.partial(jax.jit, static_argnames=("row_tile",))
def bindformer_forward(wt_feat, mut_feat, params, row_tile=1024):
    """wt_feat, mut_feat: (N, L, D).  Returns (wt_out, mut_out), same shape.

    row_tile: rows per grid step.  Default 1024 works on all generations with
    the 48 MiB vmem limit below.  Guidance: v6e can use 2048; v7x should stay
    <= 1024 (64 MiB physical VMEM) and ideally have >= 2 grid steps so both
    TensorCores get work; v5e is fine at 512-1024.  The tile is clamped for
    small problems so tiny calls do not stream padding.
    """
    N, L, D = wt_feat.shape
    M = N * L
    DP = _round_up(D, 128)                     # 168 -> 256, VMEM/weights only

    # Clamp the tile for small inputs (no wasted DMA / MXU work on padding).
    row_tile = max(8, min(row_tile, _round_up(M, 8)))
    grid = pl.cdiv(M, row_tile)

    w1, b1, w2, b2, gamma, beta = params

    def pad2(x, r, c):
        return jnp.pad(x, ((0, r - x.shape[0]), (0, c - x.shape[1])))

    # Big streamed tensors go to the kernel unpadded: (M, 168).  reshape is a
    # free metadata op (contiguous), not an HBM pass.
    wt2d = wt_feat.reshape(M, D)
    mut2d = mut_feat.reshape(M, D)

    # Weights: zero-pad to (DP, DP), cast once to bf16 (fetched once, resident).
    w1p = pad2(w1.astype(jnp.float32), DP, DP).astype(jnp.bfloat16)
    w2p = pad2(w2.astype(jnp.float32), DP, DP).astype(jnp.bfloat16)

    # Pack all per-feature vectors into a single (4, DP) block -> one DMA.
    vecs = jnp.stack([
        jnp.pad(b1.astype(jnp.float32), (0, DP - D)),
        jnp.pad(b2.astype(jnp.float32), (0, DP - D)),
        jnp.pad(gamma.astype(jnp.float32), (0, DP - D)),
        jnp.pad(beta.astype(jnp.float32), (0, DP - D)),
    ], axis=0)

    row_spec = pl.BlockSpec((row_tile, D), lambda i: (i, 0))   # last dim = full D
    w_spec = pl.BlockSpec((DP, DP), lambda i: (0, 0))
    vec_spec = pl.BlockSpec((4, DP), lambda i: (0, 0))

    kernel = functools.partial(bindformer_kernel, d_valid=D, d_pad=DP)

    wt_out, mut_out = pl.pallas_call(
        kernel,
        out_shape=(
            jax.ShapeDtypeStruct((M, D), wt_feat.dtype),
            jax.ShapeDtypeStruct((M, D), mut_feat.dtype),
        ),
        grid_spec=pltpu.PrefetchScalarGridSpec(
            num_scalar_prefetch=0,
            grid=(grid,),
            in_specs=[row_spec, row_spec, w_spec, w_spec, vec_spec],
            out_specs=[row_spec, row_spec],
            scratch_shapes=[
                pltpu.VMEM((row_tile, DP), jnp.float32),   # wt widened in VMEM
                pltpu.VMEM((row_tile, DP), jnp.float32),   # mut widened in VMEM
            ],
        ),
        compiler_params=pltpu.CompilerParams(
            dimension_semantics=("parallel",),
            vmem_limit_bytes=48 * 1024 * 1024),
    )(wt2d, mut2d, w1p, w2p, vecs)

    return wt_out.reshape(N, L, D), mut_out.reshape(N, L, D)


def init_params(key, d):
    """Deterministic synthetic init matching nn.Linear / nn.LayerNorm shapes.

    res_mlp: Linear(D, D) -> ReLU -> Linear(D, D).  Weights stored already
    transposed, i.e. shape (in, out), so the kernel does x @ W + b.
    """
    k1, k2, k3, k4 = jax.random.split(key, 4)
    bound = 1.0 / jnp.sqrt(d)
    w1 = jax.random.uniform(k1, (d, d), jnp.float32, -bound, bound)
    b1 = jax.random.uniform(k2, (d,), jnp.float32, -bound, bound)
    w2 = jax.random.uniform(k3, (d, d), jnp.float32, -bound, bound)
    b2 = jax.random.uniform(k4, (d,), jnp.float32, -bound, bound)
    gamma = jnp.ones((d,), jnp.float32)   # LayerNorm default init
    beta = jnp.zeros((d,), jnp.float32)
    return (w1, b1, w2, b2, gamma, beta)


def reference_forward(wt_feat, mut_feat, params):
    """Pure-JAX f32 reference of the same semantics (sanity check)."""
    w1, b1, w2, b2, gamma, beta = params

    def mlp(x):
        h = jnp.maximum(x @ w1 + b1, 0.0)
        return h @ w2 + b2

    wt_new = wt_feat + mlp(wt_feat - mut_feat)
    mut_new = mut_feat + mlp(mut_feat - wt_new)

    def ln(x):
        mean = jnp.mean(x, axis=-1, keepdims=True)
        var = jnp.mean((x - mean) ** 2, axis=-1, keepdims=True)
        return (x - mean) / jnp.sqrt(var + LN_EPS) * gamma + beta

    return ln(wt_new), ln(mut_new)


if __name__ == "__main__":
    key = jax.random.PRNGKey(0)
    k_wt, k_mut, k_par = jax.random.split(key, 3)

    N, L, D = 2, 8, NODE_FEAT_DIM  # small batch/seq, module-default feature dim
    wt_feat = jax.random.normal(k_wt, (N, L, D), jnp.float32)
    mut_feat = jax.random.normal(k_mut, (N, L, D), jnp.float32)
    params = init_params(k_par, D)

    wt_out, mut_out = bindformer_forward(wt_feat, mut_feat, params)
    jax.block_until_ready((wt_out, mut_out))

    ref_wt, ref_mut = reference_forward(wt_feat, mut_feat, params)
    # bf16 MXU inputs (f32 accumulation) -> loosened tolerance vs f32 reference
    assert jnp.allclose(wt_out, ref_wt, atol=5e-2, rtol=5e-2)
    assert jnp.allclose(mut_out, ref_mut, atol=5e-2, rtol=5e-2)

    print("KERNEL_OK")
</pallas_src>

<mosaic_0001>
module attributes {stable_mosaic.version = 11 : i64} {
  func.func @bindformer_kernel(%arg0: i32, %arg1: memref<16x168xf32, #tpu.memory_space<vmem>>, %arg2: memref<16x168xf32, #tpu.memory_space<vmem>>, %arg3: memref<256x256xbf16, #tpu.memory_space<vmem>>, %arg4: memref<256x256xbf16, #tpu.memory_space<vmem>>, %arg5: memref<4x256xf32, #tpu.memory_space<vmem>>, %arg6: memref<16x168xf32, #tpu.memory_space<vmem>>, %arg7: memref<16x168xf32, #tpu.memory_space<vmem>>, %arg8: memref<16x256xf32, #tpu.memory_space<vmem>>, %arg9: memref<16x256xf32, #tpu.memory_space<vmem>>) attributes {dimension_semantics = [#tpu.dimension_semantics<parallel>], iteration_bounds = array<i64: 1>, scalar_prefetch = 0 : i64, scratch_operands = 2 : i64, tpu.core_type = #tpu.core_type<tc>, window_params = [{transform_indices = @transform_0, window_bounds = array<i64: 16, 168>}, {transform_indices = @transform_1, window_bounds = array<i64: 16, 168>}, {pipeline_mode = #tpu.pipeline_mode<synchronous>, transform_indices = @transform_2, window_bounds = array<i64: 256, 256>}, {pipeline_mode = #tpu.pipeline_mode<synchronous>, transform_indices = @transform_3, window_bounds = array<i64: 256, 256>}, {pipeline_mode = #tpu.pipeline_mode<synchronous>, transform_indices = @transform_4, window_bounds = array<i64: 4, 256>}, {transform_indices = @transform_5, window_bounds = array<i64: 16, 168>}, {transform_indices = @transform_6, window_bounds = array<i64: 16, 168>}]} {
    %cst = arith.constant 0.000000e+00 : f32
    %0 = vector.broadcast %cst : f32 to vector<16x256xf32>
    %c0 = arith.constant 0 : index
    %c0_0 = arith.constant 0 : index
    %1 = vector.load %arg8[%c0, %c0_0] : memref<16x256xf32, #tpu.memory_space<vmem>>, vector<16x256xf32>
    tpu.vector_store %arg8[%c0, %c0_0], %0 {strides = array<i32>} : memref<16x256xf32, #tpu.memory_space<vmem>>, vector<16x256xf32>,
    %c0_1 = arith.constant 0 : index
    %c0_2 = arith.constant 0 : index
    %2 = vector.load %arg9[%c0_1, %c0_2] : memref<16x256xf32, #tpu.memory_space<vmem>>, vector<16x256xf32>
    tpu.vector_store %arg9[%c0_1, %c0_2], %0 {strides = array<i32>} : memref<16x256xf32, #tpu.memory_space<vmem>>, vector<16x256xf32>,
    %c0_3 = arith.constant 0 : index
    %c0_4 = arith.constant 0 : index
    %3 = vector.load %arg1[%c0_3, %c0_4] : memref<16x168xf32, #tpu.memory_space<vmem>>, vector<16x168xf32>
    %c0_5 = arith.constant 0 : index
    %c0_6 = arith.constant 0 : index
    %4 = vector.load %arg8[%c0_5, %c0_6] : memref<16x256xf32, #tpu.memory_space<vmem>>, vector<16x168xf32>
    tpu.vector_store %arg8[%c0_5, %c0_6], %3 {strides = array<i32>} : memref<16x256xf32, #tpu.memory_space<vmem>>, vector<16x168xf32>,
    %c0_7 = arith.constant 0 : index
    %c0_8 = arith.constant 0 : index
    %5 = vector.load %arg2[%c0_7, %c0_8] : memref<16x168xf32, #tpu.memory_space<vmem>>, vector<16x168xf32>
    %c0_9 = arith.constant 0 : index
    %c0_10 = arith.constant 0 : index
    %6 = vector.load %arg9[%c0_9, %c0_10] : memref<16x256xf32, #tpu.memory_space<vmem>>, vector<16x168xf32>
    tpu.vector_store %arg9[%c0_9, %c0_10], %5 {strides = array<i32>} : memref<16x256xf32, #tpu.memory_space<vmem>>, vector<16x168xf32>,
    %c0_11 = arith.constant 0 : index
    %c0_12 = arith.constant 0 : index
    %7 = vector.load %arg8[%c0_11, %c0_12] : memref<16x256xf32, #tpu.memory_space<vmem>>, vector<16x256xf32>
    %c0_13 = arith.constant 0 : index
    %c0_14 = arith.constant 0 : index
    %8 = vector.load %arg9[%c0_13, %c0_14] : memref<16x256xf32, #tpu.memory_space<vmem>>, vector<16x256xf32>
    %c0_15 = arith.constant 0 : index
    %c0_16 = arith.constant 0 : index
    %9 = vector.load %arg3[%c0_15, %c0_16] : memref<256x256xbf16, #tpu.memory_space<vmem>>, vector<256x256xbf16>
    %c0_17 = arith.constant 0 : index
    %c0_18 = arith.constant 0 : index
    %10 = vector.load %arg4[%c0_17, %c0_18] : memref<256x256xbf16, #tpu.memory_space<vmem>>, vector<256x256xbf16>
    %c0_19 = arith.constant 0 : index
    %c0_20 = arith.constant 0 : index
    %11 = vector.load %arg5[%c0_19, %c0_20] : memref<4x256xf32, #tpu.memory_space<vmem>>, vector<4x256xf32>
    %12 = vector.extract_strided_slice %11 {offsets = [0, 0], sizes = [1, 256], strides = [1, 1]} : vector<4x256xf32> to vector<1x256xf32>
    %13 = vector.extract_strided_slice %11 {offsets = [1, 0], sizes = [1, 256], strides = [1, 1]} : vector<4x256xf32> to vector<1x256xf32>
    %14 = vector.extract_strided_slice %11 {offsets = [2, 0], sizes = [1, 256], strides = [1, 1]} : vector<4x256xf32> to vector<1x256xf32>
    %15 = vector.extract_strided_slice %11 {offsets = [3, 0], sizes = [1, 256], strides = [1, 1]} : vector<4x256xf32> to vector<1x256xf32>
    %16 = tpu.iota {dimensions = array<i32: 1>} : vector<1x256xi32>
    %c168_i32 = arith.constant 168 : i32
    %17 = vector.broadcast %c168_i32 : i32 to vector<1x256xi32>
    %18 = arith.cmpi slt, %16, %17 : vector<1x256xi32>
    %19 = arith.extui %18 : vector<1x256xi1> to vector<1x256xi32>
    %20 = arith.sitofp %19 : vector<1x256xi32> to vector<1x256xf32>
    %21 = arith.subf %7, %8 : vector<16x256xf32>
    %22 = arith.truncf %21 : vector<16x256xf32> to vector<16x256xbf16>
    %cst_21 = arith.constant dense<0.000000e+00> : vector<16x256xf32>
    %23 = tpu.matmul %22, %9, %cst_21 {dimension_numbers = #tpu.dot_dimension_numbers<[1], [0], [0], [1], [0, 0, 1, 1], [], []>} : vector<16x256xbf16>, vector<256x256xbf16>, vector<16x256xf32> -> vector<16x256xf32>
    %24 = vector.broadcast %12 : vector<1x256xf32> to vector<16x256xf32>
    %25 = arith.addf %23, %24 : vector<16x256xf32>
    %cst_22 = arith.constant 0.000000e+00 : f32
    %26 = vector.broadcast %cst_22 : f32 to vector<16x256xf32>
    %27 = arith.maximumf %25, %26 : vector<16x256xf32>
    %28 = arith.truncf %27 : vector<16x256xf32> to vector<16x256xbf16>
    %cst_23 = arith.constant dense<0.000000e+00> : vector<16x256xf32>
    %29 = tpu.matmul %28, %10, %cst_23 {dimension_numbers = #tpu.dot_dimension_numbers<[1], [0], [0], [1], [0, 0, 1, 1], [], []>} : vector<16x256xbf16>, vector<256x256xbf16>, vector<16x256xf32> -> vector<16x256xf32>
    %30 = vector.broadcast %13 : vector<1x256xf32> to vector<16x256xf32>
    %31 = arith.addf %29, %30 : vector<16x256xf32>
    %32 = arith.addf %7, %31 : vector<16x256xf32>
    %33 = arith.subf %8, %32 : vector<16x256xf32>
    %34 = arith.truncf %33 : vector<16x256xf32> to vector<16x256xbf16>
    %cst_24 = arith.constant dense<0.000000e+00> : vector<16x256xf32>
    %35 = tpu.matmul %34, %9, %cst_24 {dimension_numbers = #tpu.dot_dimension_numbers<[1], [0], [0], [1], [0, 0, 1, 1], [], []>} : vector<16x256xbf16>, vector<256x256xbf16>, vector<16x256xf32> -> vector<16x256xf32>
    %36 = vector.broadcast %12 : vector<1x256xf32> to vector<16x256xf32>
    %37 = arith.addf %35, %36 : vector<16x256xf32>
    %cst_25 = arith.constant 0.000000e+00 : f32
    %38 = vector.broadcast %cst_25 : f32 to vector<16x256xf32>
    %39 = arith.maximumf %37, %38 : vector<16x256xf32>
    %40 = arith.truncf %39 : vector<16x256xf32> to vector<16x256xbf16>
    %cst_26 = arith.constant dense<0.000000e+00> : vector<16x256xf32>
    %41 = tpu.matmul %40, %10, %cst_26 {dimension_numbers = #tpu.dot_dimension_numbers<[1], [0], [0], [1], [0, 0, 1, 1], [], []>} : vector<16x256xbf16>, vector<256x256xbf16>, vector<16x256xf32> -> vector<16x256xf32>
    %42 = vector.broadcast %13 : vector<1x256xf32> to vector<16x256xf32>
    %43 = arith.addf %41, %42 : vector<16x256xf32>
    %44 = arith.addf %8, %43 : vector<16x256xf32>
    %cst_27 = arith.constant dense<0.000000e+00> : vector<16xf32>
    %45 = vector.multi_reduction <add>, %32, %cst_27 [1] : vector<16x256xf32> to vector<16xf32>
    %46 = vector.shape_cast %45 : vector<16xf32> to vector<16x1xf32>
    %cst_28 = arith.constant 0.00595238106 : f32
    %47 = vector.broadcast %cst_28 : f32 to vector<16x1xf32>
    %48 = arith.mulf %46, %47 : vector<16x1xf32>
    %49 = vector.broadcast %48 : vector<16x1xf32> to vector<16x256xf32>
    %50 = arith.subf %32, %49 : vector<16x256xf32>
    %51 = vector.broadcast %20 : vector<1x256xf32> to vector<16x256xf32>
    %52 = arith.mulf %50, %51 : vector<16x256xf32>
    %53 = arith.mulf %52, %52 : vector<16x256xf32>
    %cst_29 = arith.constant dense<0.000000e+00> : vector<16xf32>
    %54 = vector.multi_reduction <add>, %53, %cst_29 [1] : vector<16x256xf32> to vector<16xf32>
    %55 = vector.shape_cast %54 : vector<16xf32> to vector<16x1xf32>
    %cst_30 = arith.constant 0.00595238106 : f32
    %56 = vector.broadcast %cst_30 : f32 to vector<16x1xf32>
    %57 = arith.mulf %55, %56 : vector<16x1xf32>
    %cst_31 = arith.constant 9.99999974E-6 : f32
    %58 = vector.broadcast %cst_31 : f32 to vector<16x1xf32>
    %59 = arith.addf %57, %58 : vector<16x1xf32>
    %60 = math.rsqrt %59 : vector<16x1xf32>
    %61 = vector.broadcast %60 : vector<16x1xf32> to vector<16x256xf32>
    %62 = arith.mulf %52, %61 : vector<16x256xf32>
    %63 = vector.broadcast %14 : vector<1x256xf32> to vector<16x256xf32>
    %64 = arith.mulf %62, %63 : vector<16x256xf32>
    %65 = vector.broadcast %15 : vector<1x256xf32> to vector<16x256xf32>
    %66 = arith.addf %64, %65 : vector<16x256xf32>
    %67 = vector.extract_strided_slice %66 {offsets = [0, 0], sizes = [16, 168], strides = [1, 1]} : vector<16x256xf32> to vector<16x168xf32>
    %c0_32 = arith.constant 0 : index
    %c0_33 = arith.constant 0 : index
    %68 = vector.load %arg6[%c0_32, %c0_33] : memref<16x168xf32, #tpu.memory_space<vmem>>, vector<16x168xf32>
    tpu.vector_store %arg6[%c0_32, %c0_33], %67 {strides = array<i32>} : memref<16x168xf32, #tpu.memory_space<vmem>>, vector<16x168xf32>,
    %cst_34 = arith.constant dense<0.000000e+00> : vector<16xf32>
    %69 = vector.multi_reduction <add>, %44, %cst_34 [1] : vector<16x256xf32> to vector<16xf32>
    %70 = vector.shape_cast %69 : vector<16xf32> to vector<16x1xf32>
    %cst_35 = arith.constant 0.00595238106 : f32
    %71 = vector.broadcast %cst_35 : f32 to vector<16x1xf32>
    %72 = arith.mulf %70, %71 : vector<16x1xf32>
    %73 = vector.broadcast %72 : vector<16x1xf32> to vector<16x256xf32>
    %74 = arith.subf %44, %73 : vector<16x256xf32>
    %75 = vector.broadcast %20 : vector<1x256xf32> to vector<16x256xf32>
    %76 = arith.mulf %74, %75 : vector<16x256xf32>
    %77 = arith.mulf %76, %76 : vector<16x256xf32>
    %cst_36 = arith.constant dense<0.000000e+00> : vector<16xf32>
    %78 = vector.multi_reduction <add>, %77, %cst_36 [1] : vector<16x256xf32> to vector<16xf32>
    %79 = vector.shape_cast %78 : vector<16xf32> to vector<16x1xf32>
    %cst_37 = arith.constant 0.00595238106 : f32
    %80 = vector.broadcast %cst_37 : f32 to vector<16x1xf32>
    %81 = arith.mulf %79, %80 : vector<16x1xf32>
    %cst_38 = arith.constant 9.99999974E-6 : f32
    %82 = vector.broadcast %cst_38 : f32 to vector<16x1xf32>
    %83 = arith.addf %81, %82 : vector<16x1xf32>
    %84 = math.rsqrt %83 : vector<16x1xf32>
    %85 = vector.broadcast %84 : vector<16x1xf32> to vector<16x256xf32>
    %86 = arith.mulf %76, %85 : vector<16x256xf32>
    %87 = vector.broadcast %14 : vector<1x256xf32> to vector<16x256xf32>
    %88 = arith.mulf %86, %87 : vector<16x256xf32>
    %89 = vector.broadcast %15 : vector<1x256xf32> to vector<16x256xf32>
    %90 = arith.addf %88, %89 : vector<16x256xf32>
    %91 = vector.extract_strided_slice %90 {offsets = [0, 0], sizes = [16, 168], strides = [1, 1]} : vector<16x256xf32> to vector<16x168xf32>
    %c0_39 = arith.constant 0 : index
    %c0_40 = arith.constant 0 : index
    %92 = vector.load %arg7[%c0_39, %c0_40] : memref<16x168xf32, #tpu.memory_space<vmem>>, vector<16x168xf32>
    tpu.vector_store %arg7[%c0_39, %c0_40], %91 {strides = array<i32>} : memref<16x168xf32, #tpu.memory_space<vmem>>, vector<16x168xf32>,
    return
  }
  func.func @transform_0(%arg0: i32) -> (i32, i32) {
    %c0_i32 = arith.constant 0 : i32
    %c0_i32_0 = arith.constant 0 : i32
    return %arg0, %c0_i32 : i32, i32
  }
  func.func @transform_1(%arg0: i32) -> (i32, i32) {
    %c0_i32 = arith.constant 0 : i32
    %c0_i32_0 = arith.constant 0 : i32
    return %arg0, %c0_i32 : i32, i32
  }
  func.func @transform_2(%arg0: i32) -> (i32, i32) {
    %c0_i32 = arith.constant 0 : i32
    %c0_i32_0 = arith.constant 0 : i32
    %c0_i32_1 = arith.constant 0 : i32
    return %c0_i32, %c0_i32_0 : i32, i32
  }
  func.func @transform_3(%arg0: i32) -> (i32, i32) {
    %c0_i32 = arith.constant 0 : i32
    %c0_i32_0 = arith.constant 0 : i32
    %c0_i32_1 = arith.constant 0 : i32
    return %c0_i32, %c0_i32_0 : i32, i32
  }
  func.func @transform_4(%arg0: i32) -> (i32, i32) {
    %c0_i32 = arith.constant 0 : i32
    %c0_i32_0 = arith.constant 0 : i32
    %c0_i32_1 = arith.constant 0 : i32
    return %c0_i32, %c0_i32_0 : i32, i32
  }
  func.func @transform_5(%arg0: i32) -> (i32, i32) {
    %c0_i32 = arith.constant 0 : i32
    %c0_i32_0 = arith.constant 0 : i32
    return %arg0, %c0_i32 : i32, i32
  }
  func.func @transform_6(%arg0: i32) -> (i32, i32) {
    %c0_i32 = arith.constant 0 : i32
    %c0_i32_0 = arith.constant 0 : i32
    return %arg0, %c0_i32 : i32, i32
  }
}

</mosaic_0001>

<llo_original>
// kernel: bindformer_forward.1
$region0: #{bindformer_forward.1}
  #allocation0 [shape = 'u32[]', space=smem, size = 0x4, offset = 0x4, fixed_abs, tag = 'smem constant byte address 0x4 - core index']
  #allocation1 [shape = 'u32[144,128]{1,0:T(1,128)}', space=vmem, size = 0x12000, scoped, tag = 'internal scratch']
  #allocation2 [shape = 'f32[16,256]{1,0:T(8,128)}', space=vmem, size = 0x4000, scoped, tag = 'scratch operand']
  #allocation3 [shape = 'f32[16,256]{1,0:T(8,128)}', space=vmem, size = 0x4000, scoped, tag = 'scratch operand']
  %s0 = inlined_call_operand.vmem [shape: f32[16,168], index: 0, kind: input, shape index: {}]
  %s1 = inlined_call_operand.vmem [shape: f32[16,168], index: 1, kind: input, shape index: {}]
  %s2 = inlined_call_operand.vmem [shape: bf16[256,256], index: 2, kind: input, shape index: {}]
  %s3 = inlined_call_operand.vmem [shape: bf16[256,256], index: 3, kind: input, shape index: {}]
  %s4 = inlined_call_operand.vmem [shape: f32[4,256], index: 4, kind: input, shape index: {}]
  %s5 = inlined_call_operand.hbm [shape: f32[16,168], index: 5, kind: output, shape index: {0}]
  %s6 = inlined_call_operand.hbm [shape: f32[16,168], index: 6, kind: output, shape index: {1}]
  %7 = xla_tuple %s5, %s6
  %s8 = sld [smem:[#allocation0]]
  $region38: #{bindformer_forward.1} parent=0
    _
  %s10 = ssub.s32 1, %s8
  %s11 = scalar_select 0, %s10, %s8
  $region1: #{bindformer_forward.1} parent=0
    #allocation4 [shape = 'u8[16384]{0}', space=vmem, size = 0x4000, scoped, tag = 'output window, operand 0, single buffered']
    #allocation5 [shape = 's32[1]{0}', space=sflag, size = 0x4, scoped, tag = 'scoped memory for bindformer_forward.1']
    #allocation6 [shape = 'u8[16384]{0}', space=vmem, size = 0x4000, scoped, tag = 'output window, operand 1, single buffered']
    #allocation7 [shape = 's32[1]{0}', space=sflag, size = 0x4, scoped, tag = 'scoped memory for bindformer_forward.1']
    %12 = vsyncpa [#allocation5], 0
    %13 = vsyncpa [#allocation7], 0
    // Predicated region
    $region2: #{bindformer_forward.1} parent=1 // pred_check
      _
    $region3: #{bindformer_forward.1} parent=1 // pred_check_branch
      %15 = sbr.rel (0) target = $region5
    $region4: #{bindformer_forward.1} parent=1 // pred_region
      _
    $region5: #{bindformer_forward.1} parent=1 // pred_fallthru
      _
    // Predicated region
    $region6: #{bindformer_forward.1} parent=1 // pred_check
      _
    $region7: #{bindformer_forward.1} parent=1 // pred_check_branch
      %17 = sbr.rel (0) target = $region9
    $region8: #{bindformer_forward.1} parent=1 // pred_region
      _
    $region9: #{bindformer_forward.1} parent=1 // pred_fallthru
      _
    // Predicated region
    $region10: #{bindformer_forward.1} parent=1 // pred_check
      _
    $region11: #{bindformer_forward.1} parent=1 // pred_check_branch
      %19 = sbr.rel (0) target = $region13
    $region12: #{bindformer_forward.1} parent=1 // pred_region
      _
    $region13: #{bindformer_forward.1} parent=1 // pred_fallthru
      _
    // Predicated region
    $region14: #{bindformer_forward.1} parent=1 // pred_check
      _
    $region15: #{bindformer_forward.1} parent=1 // pred_check_branch
      %21 = sbr.rel (0) target = $region17
    $region16: #{bindformer_forward.1} parent=1 // pred_region
      _
    $region17: #{bindformer_forward.1} parent=1 // pred_fallthru
      _
    // Predicated region
    $region18: #{bindformer_forward.1} parent=1 // pred_check
      _
    $region19: #{bindformer_forward.1} parent=1 // pred_check_branch
      %23 = sbr.rel (0) target = $region21
    $region20: #{bindformer_forward.1} parent=1 // pred_region
      _
    $region21: #{bindformer_forward.1} parent=1 // pred_fallthru
      _
    %24 = vst [vmem:[#allocation2] sm:$0xff] 0.0
    %25 = vst [vmem:[#allocation2 + $0x8] sm:$0xff] 0.0
    %26 = vst [vmem:[#allocation2 + $0x10] sm:$0xff] 0.0
    %27 = vst [vmem:[#allocation2 + $0x18] sm:$0xff] 0.0
    %28 = vst [vmem:[#allocation3] sm:$0xff] 0.0
    %29 = vst [vmem:[#allocation3 + $0x8] sm:$0xff] 0.0
    %30 = vst [vmem:[#allocation3 + $0x10] sm:$0xff] 0.0
    %31 = vst [vmem:[#allocation3 + $0x18] sm:$0xff] 0.0
    %v32 = vld [vmem:[%s0] sm:$0xff]
    %v33 = vld [vmem:[%s0 + $0x8] sm:$0xff]
    %v34 = vld [vmem:[%s0 + $0x10] sm:$0xff]
    %v35 = vld [vmem:[%s0 + $0x18] sm:$0xff]
    %36 = vst [vmem:[#allocation2] sm:$0xff] %v32
    %vm37 = vcmask 326656
    %38 = vst.msk [vmem:[#allocation2 + $0x8] sm:$0xff] %vm37, %v33
    %39 = vst [vmem:[#allocation2 + $0x10] sm:$0xff] %v34
    %40 = vst.msk [vmem:[#allocation2 + $0x18] sm:$0xff] %vm37, %v35
    %v41 = vld [vmem:[%s1] sm:$0xff]
    %v42 = vld [vmem:[%s1 + $0x8] sm:$0xff]
    %v43 = vld [vmem:[%s1 + $0x10] sm:$0xff]
    %v44 = vld [vmem:[%s1 + $0x18] sm:$0xff]
    %45 = vst [vmem:[#allocation3] sm:$0xff] %v41
    %46 = vst.msk [vmem:[#allocation3 + $0x8] sm:$0xff] %vm37, %v42
    %47 = vst [vmem:[#allocation3 + $0x10] sm:$0xff] %v43
    %48 = vst.msk [vmem:[#allocation3 + $0x18] sm:$0xff] %vm37, %v44
    %v49 = vld [vmem:[#allocation2] sm:$0xff]
    %v50 = vld [vmem:[#allocation2 + $0x8] sm:$0xff]
    %v51 = vld [vmem:[#allocation2 + $0x10] sm:$0xff]
    %v52 = vld [vmem:[#allocation2 + $0x18] sm:$0xff]
    %v53 = vld [vmem:[#allocation3] sm:$0xff]
    %v54 = vld [vmem:[#allocation3 + $0x8] sm:$0xff]
    %v55 = vld [vmem:[#allocation3 + $0x10] sm:$0xff]
    %v56 = vld [vmem:[#allocation3 + $0x18] sm:$0xff]
    %v57 = vld [vmem:[%s2] sm:$0xff]
    %v58 = vld [vmem:[%s2 + $0x8] sm:$0xff]
    %v59 = vld [vmem:[%s2 + $0x10] sm:$0xff]
    %v60 = vld [vmem:[%s2 + $0x18] sm:$0xff]
    %v61 = vld [vmem:[%s2 + $0x20] sm:$0xff]
    %v62 = vld [vmem:[%s2 + $0x28] sm:$0xff]
    %v63 = vld [vmem:[%s2 + $0x30] sm:$0xff]
    %v64 = vld [vmem:[%s2 + $0x38] sm:$0xff]
    %v65 = vld [vmem:[%s2 + $0x40] sm:$0xff]
    %v66 = vld [vmem:[%s2 + $0x48] sm:$0xff]
    %v67 = vld [vmem:[%s2 + $0x50] sm:$0xff]
    %v68 = vld [vmem:[%s2 + $0x58] sm:$0xff]
    %v69 = vld [vmem:[%s2 + $0x60] sm:$0xff]
    %v70 = vld [vmem:[%s2 + $0x68] sm:$0xff]
    %v71 = vld [vmem:[%s2 + $0x70] sm:$0xff]
    %v72 = vld [vmem:[%s2 + $0x78] sm:$0xff]
    %v73 = vld [vmem:[%s2 + $0x80] sm:$0xff]
    %v74 = vld [vmem:[%s2 + $0x88] sm:$0xff]
    %v75 = vld [vmem:[%s2 + $0x90] sm:$0xff]
    %v76 = vld [vmem:[%s2 + $0x98] sm:$0xff]
    %v77 = vld [vmem:[%s2 + $0xa0] sm:$0xff]
    %v78 = vld [vmem:[%s2 + $0xa8] sm:$0xff]
    %v79 = vld [vmem:[%s2 + $0xb0] sm:$0xff]
    %v80 = vld [vmem:[%s2 + $0xb8] sm:$0xff]
    %v81 = vld [vmem:[%s2 + $0xc0] sm:$0xff]
    %v82 = vld [vmem:[%s2 + $0xc8] sm:$0xff]
    %v83 = vld [vmem:[%s2 + $0xd0] sm:$0xff]
    %v84 = vld [vmem:[%s2 + $0xd8] sm:$0xff]
    %v85 = vld [vmem:[%s2 + $0xe0] sm:$0xff]
    %v86 = vld [vmem:[%s2 + $0xe8] sm:$0xff]
    %v87 = vld [vmem:[%s2 + $0xf0] sm:$0xff]
    %v88 = vld [vmem:[%s2 + $0xf8] sm:$0xff]
    %v89 = vld [vmem:[%s3] sm:$0xff]
    %v90 = vld [vmem:[%s3 + $0x8] sm:$0xff]
    %v91 = vld [vmem:[%s3 + $0x10] sm:$0xff]
    %v92 = vld [vmem:[%s3 + $0x18] sm:$0xff]
    %v93 = vld [vmem:[%s3 + $0x20] sm:$0xff]
    %v94 = vld [vmem:[%s3 + $0x28] sm:$0xff]
    %v95 = vld [vmem:[%s3 + $0x30] sm:$0xff]
    %v96 = vld [vmem:[%s3 + $0x38] sm:$0xff]
    %v97 = vld [vmem:[%s3 + $0x40] sm:$0xff]
    %v98 = vld [vmem:[%s3 + $0x48] sm:$0xff]
    %v99 = vld [vmem:[%s3 + $0x50] sm:$0xff]
    %v100 = vld [vmem:[%s3 + $0x58] sm:$0xff]
    %v101 = vld [vmem:[%s3 + $0x60] sm:$0xff]
    %v102 = vld [vmem:[%s3 + $0x68] sm:$0xff]
    %v103 = vld [vmem:[%s3 + $0x70] sm:$0xff]
    %v104 = vld [vmem:[%s3 + $0x78] sm:$0xff]
    %v105 = vld [vmem:[%s3 + $0x80] sm:$0xff]
    %v106 = vld [vmem:[%s3 + $0x88] sm:$0xff]
    %v107 = vld [vmem:[%s3 + $0x90] sm:$0xff]
    %v108 = vld [vmem:[%s3 + $0x98] sm:$0xff]
    %v109 = vld [vmem:[%s3 + $0xa0] sm:$0xff]
    %v110 = vld [vmem:[%s3 + $0xa8] sm:$0xff]
    %v111 = vld [vmem:[%s3 + $0xb0] sm:$0xff]
    %v112 = vld [vmem:[%s3 + $0xb8] sm:$0xff]
    %v113 = vld [vmem:[%s3 + $0xc0] sm:$0xff]
    %v114 = vld [vmem:[%s3 + $0xc8] sm:$0xff]
    %v115 = vld [vmem:[%s3 + $0xd0] sm:$0xff]
    %v116 = vld [vmem:[%s3 + $0xd8] sm:$0xff]
    %v117 = vld [vmem:[%s3 + $0xe0] sm:$0xff]
    %v118 = vld [vmem:[%s3 + $0xe8] sm:$0xff]
    %v119 = vld [vmem:[%s3 + $0xf0] sm:$0xff]
    %v120 = vld [vmem:[%s3 + $0xf8] sm:$0xff]
    %v121 = vld [vmem:[%s4] sm:$0xff]
    %v122 = vlaneseq
    %v123 = vand.u32 %v122, 127
    %v124 = vadd.s32 %v123, 128
    %vm125 = vcmp.lt.s32.totalorder %v123, 168
    %vm126 = vcmp.lt.s32.totalorder %v124, 168
    %v127 = vsel %vm125, 1, 0
    %v128 = vsel %vm126, 1, 0
    %v129 = vcvt.s32.f32 %v127
    %v130 = vcvt.s32.f32 %v128
    %v131 = vsub.f32 %v49, %v53
    %v132 = vsub.f32 %v50, %v54
    %v133 = vsub.f32 %v51, %v55
    %v134 = vsub.f32 %v52, %v56
    %v135 = vpack.c.bf16 %v133, %v131
    %v136 = vpack.c.bf16 %v134, %v132
    %v138 = vlaneseq
    %v139 = vshrl.u32 %v138, 7
    %v140 = vsub.s32 0, %v139
    %v141 = vrot.slane %v121, %v140
    %v142 = vlaneseq
    %v143 = vshrl.u32 %v142, 7
    %v144 = vsub.s32 4, %v143
    %v145 = vrot.slane %v121, %v144
    %v148 = vlaneseq
    %v149 = vshrl.u32 %v148, 7
    %v150 = vsub.s32 0, %v149
    %v151 = vrot.slane %v141, %v150
    %v152 = vlaneseq
    %v153 = vshrl.u32 %v152, 7
    %v154 = vsub.s32 0, %v153
    %v155 = vrot.slane %v145, %v154
    %v188 = vunpack.c.l.b16 %v57
    %v189 = vunpack.c.h.b16 %v57
    %v190 = vunpack.c.l.b16 %v58
    %v191 = vunpack.c.h.b16 %v58
    %v192 = vunpack.c.l.b16 %v59
    %v193 = vunpack.c.h.b16 %v59
    %v194 = vunpack.c.l.b16 %v60
    %v195 = vunpack.c.h.b16 %v60
    %v196 = vunpack.c.l.b16 %v61
    %v197 = vunpack.c.h.b16 %v61
    %v198 = vunpack.c.l.b16 %v62
    %v199 = vunpack.c.h.b16 %v62
    %v200 = vunpack.c.l.b16 %v63
    %v201 = vunpack.c.h.b16 %v63
    %v202 = vunpack.c.l.b16 %v64
    %v203 = vunpack.c.h.b16 %v64
    %v204 = vunpack.c.l.b16 %v65
    %v205 = vunpack.c.h.b16 %v65
    %v206 = vunpack.c.l.b16 %v66
    %v207 = vunpack.c.h.b16 %v66
    %v208 = vunpack.c.l.b16 %v67
    %v209 = vunpack.c.h.b16 %v67
    %v210 = vunpack.c.l.b16 %v68
    %v211 = vunpack.c.h.b16 %v68
    %v212 = vunpack.c.l.b16 %v69
    %v213 = vunpack.c.h.b16 %v69
    %v214 = vunpack.c.l.b16 %v70
    %v215 = vunpack.c.h.b16 %v70
    %v216 = vunpack.c.l.b16 %v71
    %v217 = vunpack.c.h.b16 %v71
    %v218 = vunpack.c.l.b16 %v72
    %v219 = vunpack.c.h.b16 %v72
    %v220 = vunpack.c.l.b16 %v73
    %v221 = vunpack.c.h.b16 %v73
    %v222 = vunpack.c.l.b16 %v74
    %v223 = vunpack.c.h.b16 %v74
    %v224 = vunpack.c.l.b16 %v75
    %v225 = vunpack.c.h.b16 %v75
    %v226 = vunpack.c.l.b16 %v76
    %v227 = vunpack.c.h.b16 %v76
    %v228 = vunpack.c.l.b16 %v77
    %v229 = vunpack.c.h.b16 %v77
    %v230 = vunpack.c.l.b16 %v78
    %v231 = vunpack.c.h.b16 %v78
    %v232 = vunpack.c.l.b16 %v79
    %v233 = vunpack.c.h.b16 %v79
    %v234 = vunpack.c.l.b16 %v80
    %v235 = vunpack.c.h.b16 %v80
    %v236 = vunpack.c.l.b16 %v81
    %v237 = vunpack.c.h.b16 %v81
    %v238 = vunpack.c.l.b16 %v82
    %v239 = vunpack.c.h.b16 %v82
    %v240 = vunpack.c.l.b16 %v83
    %v241 = vunpack.c.h.b16 %v83
    %v242 = vunpack.c.l.b16 %v84
    %v243 = vunpack.c.h.b16 %v84
    %v244 = vunpack.c.l.b16 %v85
    %v245 = vunpack.c.h.b16 %v85
    %v246 = vunpack.c.l.b16 %v86
    %v247 = vunpack.c.h.b16 %v86
    %v248 = vunpack.c.l.b16 %v87
    %v249 = vunpack.c.h.b16 %v87
    %v250 = vunpack.c.l.b16 %v88
    %v251 = vunpack.c.h.b16 %v88
    %v252 = vpack.c.b16 %v190, %v188
    %v253 = vpack.c.b16 %v191, %v189
    %v254 = vpack.c.b16 %v194, %v192
    %v255 = vpack.c.b16 %v195, %v193
    %v256 = vpack.c.b16 %v198, %v196
    %v257 = vpack.c.b16 %v199, %v197
    %v258 = vpack.c.b16 %v202, %v200
    %v259 = vpack.c.b16 %v203, %v201
    %v260 = vpack.c.b16 %v206, %v204
    %v261 = vpack.c.b16 %v207, %v205
    %v262 = vpack.c.b16 %v210, %v208
    %v263 = vpack.c.b16 %v211, %v209
    %v264 = vpack.c.b16 %v214, %v212
    %v265 = vpack.c.b16 %v215, %v213
    %v266 = vpack.c.b16 %v218, %v216
    %v267 = vpack.c.b16 %v219, %v217
    %v268 = vpack.c.b16 %v222, %v220
    %v269 = vpack.c.b16 %v223, %v221
    %v270 = vpack.c.b16 %v226, %v224
    %v271 = vpack.c.b16 %v227, %v225
    %v272 = vpack.c.b16 %v230, %v228
    %v273 = vpack.c.b16 %v231, %v229
    %v274 = vpack.c.b16 %v234, %v232
    %v275 = vpack.c.b16 %v235, %v233
    %v276 = vpack.c.b16 %v238, %v236
    %v277 = vpack.c.b16 %v239, %v237
    %v278 = vpack.c.b16 %v242, %v240
    %v279 = vpack.c.b16 %v243, %v241
    %v280 = vpack.c.b16 %v246, %v244
    %v281 = vpack.c.b16 %v247, %v245
    %v282 = vpack.c.b16 %v250, %v248
    %v283 = vpack.c.b16 %v251, %v249
    %316 = vmatprep.subr.bf16.mxu0 %v267
    %317 = vmatpush1.bf16.msra.mxu0 %v266
    %318 = vmatprep.subr.bf16.mxu0 %v265
    %319 = vmatpush1.bf16.msra.mxu0 %v264
    %320 = vmatprep.subr.bf16.mxu0 %v263
    %321 = vmatpush1.bf16.msra.mxu0 %v262
    %322 = vmatprep.subr.bf16.mxu0 %v261
    %323 = vmatpush1.bf16.msra.mxu0 %v260
    %324 = vmatprep.subr.bf16.mxu0 %v259
    %325 = vmatpush1.bf16.msra.mxu0 %v258
    %326 = vmatprep.subr.bf16.mxu0 %v257
    %327 = vmatpush1.bf16.msra.mxu0 %v256
    %328 = vmatprep.subr.bf16.mxu0 %v255
    %329 = vmatpush1.bf16.msra.mxu0 %v254
    %330 = vmatprep.subr.bf16.mxu0 %v253
    %331 = vmatpush1.bf16.msra.mxu0 %v252
    %332 = vmatprep.subr.bf16.mxu0 %v283
    %333 = vmatpush2.bf16.msra.mxu0 %v282
    %334 = vmatprep.subr.bf16.mxu0 %v281
    %335 = vmatpush2.bf16.msra.mxu0 %v280
    %336 = vmatprep.subr.bf16.mxu0 %v279
    %337 = vmatpush2.bf16.msra.mxu0 %v278
    %338 = vmatprep.subr.bf16.mxu0 %v277
    %339 = vmatpush2.bf16.msra.mxu0 %v276
    %340 = vmatprep.subr.bf16.mxu0 %v275
    %341 = vmatpush2.bf16.msra.mxu0 %v274
    %342 = vmatprep.subr.bf16.mxu0 %v273
    %343 = vmatpush2.bf16.msra.mxu0 %v272
    %344 = vmatprep.subr.bf16.mxu0 %v271
    %345 = vmatpush2.bf16.msra.mxu0 %v270
    %346 = vmatprep.subr.bf16.mxu0 %v269
    %347 = vmatpush2.bf16.msra.mxu0 %v268
    %348 = vmatprep.mubr.bf16.mxu0 %v136
    %349 = vmatmul.mubr.bf16.gmra.mxu0 %v135
    %v350 = vpop.f32.mrf.mxu0
    %v351 = vadd.f32 %v151, %v350
    %v352 = vpop.f32.mrf.mxu0
    %v353 = vadd.f32 %v155, %v352
    %v354 = vpop.f32.mrf.mxu0
    %v355 = vadd.f32 %v151, %v354
    %v356 = vpop.f32.mrf.mxu0
    %v357 = vadd.f32 %v155, %v356
    %358 = vdwg.mxu0
    %v359 = vmax.f32 %v351, 0.0
    %v360 = vmax.f32 %v353, 0.0
    %v361 = vmax.f32 %v355, 0.0
    %v362 = vmax.f32 %v357, 0.0
    %v363 = vpack.c.bf16 %v361, %v359
    %v364 = vpack.c.bf16 %v362, %v360
    %v365 = vlaneseq
    %v366 = vshrl.u32 %v365, 7
    %v367 = vsub.s32 1, %v366
    %v368 = vrot.slane %v121, %v367
    %v369 = vlaneseq
    %v370 = vshrl.u32 %v369, 7
    %v371 = vsub.s32 5, %v370
    %v372 = vrot.slane %v121, %v371
    %v375 = vlaneseq
    %v376 = vshrl.u32 %v375, 7
    %v377 = vsub.s32 1, %v376
    %v378 = vrot.slane %v368, %v377
    %v379 = vlaneseq
    %v380 = vshrl.u32 %v379, 7
    %v381 = vsub.s32 1, %v380
    %v382 = vrot.slane %v372, %v381
    %v415 = vunpack.c.l.b16 %v89
    %v416 = vunpack.c.h.b16 %v89
    %v417 = vunpack.c.l.b16 %v90
    %v418 = vunpack.c.h.b16 %v90
    %v419 = vunpack.c.l.b16 %v91
    %v420 = vunpack.c.h.b16 %v91
    %v421 = vunpack.c.l.b16 %v92
    %v422 = vunpack.c.h.b16 %v92
    %v423 = vunpack.c.l.b16 %v93
    %v424 = vunpack.c.h.b16 %v93
    %v425 = vunpack.c.l.b16 %v94
    %v426 = vunpack.c.h.b16 %v94
    %v427 = vunpack.c.l.b16 %v95
    %v428 = vunpack.c.h.b16 %v95
    %v429 = vunpack.c.l.b16 %v96
    %v430 = vunpack.c.h.b16 %v96
    %v431 = vunpack.c.l.b16 %v97
    %v432 = vunpack.c.h.b16 %v97
    %v433 = vunpack.c.l.b16 %v98
    %v434 = vunpack.c.h.b16 %v98
    %v435 = vunpack.c.l.b16 %v99
    %v436 = vunpack.c.h.b16 %v99
    %v437 = vunpack.c.l.b16 %v100
    %v438 = vunpack.c.h.b16 %v100
    %v439 = vunpack.c.l.b16 %v101
    %v440 = vunpack.c.h.b16 %v101
    %v441 = vunpack.c.l.b16 %v102
    %v442 = vunpack.c.h.b16 %v102
    %v443 = vunpack.c.l.b16 %v103
    %v444 = vunpack.c.h.b16 %v103
    %v445 = vunpack.c.l.b16 %v104
    %v446 = vunpack.c.h.b16 %v104
    %v447 = vunpack.c.l.b16 %v105
    %v448 = vunpack.c.h.b16 %v105
    %v449 = vunpack.c.l.b16 %v106
    %v450 = vunpack.c.h.b16 %v106
    %v451 = vunpack.c.l.b16 %v107
    %v452 = vunpack.c.h.b16 %v107
    %v453 = vunpack.c.l.b16 %v108
    %v454 = vunpack.c.h.b16 %v108
    %v455 = vunpack.c.l.b16 %v109
    %v456 = vunpack.c.h.b16 %v109
    %v457 = vunpack.c.l.b16 %v110
    %v458 = vunpack.c.h.b16 %v110
    %v459 = vunpack.c.l.b16 %v111
    %v460 = vunpack.c.h.b16 %v111
    %v461 = vunpack.c.l.b16 %v112
    %v462 = vunpack.c.h.b16 %v112
    %v463 = vunpack.c.l.b16 %v113
    %v464 = vunpack.c.h.b16 %v113
    %v465 = vunpack.c.l.b16 %v114
    %v466 = vunpack.c.h.b16 %v114
    %v467 = vunpack.c.l.b16 %v115
    %v468 = vunpack.c.h.b16 %v115
    %v469 = vunpack.c.l.b16 %v116
    %v470 = vunpack.c.h.b16 %v116
    %v471 = vunpack.c.l.b16 %v117
    %v472 = vunpack.c.h.b16 %v117
    %v473 = vunpack.c.l.b16 %v118
    %v474 = vunpack.c.h.b16 %v118
    %v475 = vunpack.c.l.b16 %v119
    %v476 = vunpack.c.h.b16 %v119
    %v477 = vunpack.c.l.b16 %v120
    %v478 = vunpack.c.h.b16 %v120
    %v479 = vpack.c.b16 %v417, %v415
    %v480 = vpack.c.b16 %v418, %v416
    %v481 = vpack.c.b16 %v421, %v419
    %v482 = vpack.c.b16 %v422, %v420
    %v483 = vpack.c.b16 %v425, %v423
    %v484 = vpack.c.b16 %v426, %v424
    %v485 = vpack.c.b16 %v429, %v427
    %v486 = vpack.c.b16 %v430, %v428
    %v487 = vpack.c.b16 %v433, %v431
    %v488 = vpack.c.b16 %v434, %v432
    %v489 = vpack.c.b16 %v437, %v435
    %v490 = vpack.c.b16 %v438, %v436
    %v491 = vpack.c.b16 %v441, %v439
    %v492 = vpack.c.b16 %v442, %v440
    %v493 = vpack.c.b16 %v445, %v443
    %v494 = vpack.c.b16 %v446, %v444
    %v495 = vpack.c.b16 %v449, %v447
    %v496 = vpack.c.b16 %v450, %v448
    %v497 = vpack.c.b16 %v453, %v451
    %v498 = vpack.c.b16 %v454, %v452
    %v499 = vpack.c.b16 %v457, %v455
    %v500 = vpack.c.b16 %v458, %v456
    %v501 = vpack.c.b16 %v461, %v459
    %v502 = vpack.c.b16 %v462, %v460
    %v503 = vpack.c.b16 %v465, %v463
    %v504 = vpack.c.b16 %v466, %v464
    %v505 = vpack.c.b16 %v469, %v467
    %v506 = vpack.c.b16 %v470, %v468
    %v507 = vpack.c.b16 %v473, %v471
    %v508 = vpack.c.b16 %v474, %v472
    %v509 = vpack.c.b16 %v477, %v475
    %v510 = vpack.c.b16 %v478, %v476
    %543 = vmatprep.subr.bf16.mxu0 %v494
    %544 = vmatpush1.bf16.msra.mxu0 %v493
    %545 = vmatprep.subr.bf16.mxu0 %v492
    %546 = vmatpush1.bf16.msra.mxu0 %v491
    %547 = vmatprep.subr.bf16.mxu0 %v490
    %548 = vmatpush1.bf16.msra.mxu0 %v489
    %549 = vmatprep.subr.bf16.mxu0 %v488
    %550 = vmatpush1.bf16.msra.mxu0 %v487
    %551 = vmatprep.subr.bf16.mxu0 %v486
    %552 = vmatpush1.bf16.msra.mxu0 %v485
    %553 = vmatprep.subr.bf16.mxu0 %v484
    %554 = vmatpush1.bf16.msra.mxu0 %v483
    %555 = vmatprep.subr.bf16.mxu0 %v482
    %556 = vmatpush1.bf16.msra.mxu0 %v481
    %557 = vmatprep.subr.bf16.mxu0 %v480
    %558 = vmatpush1.bf16.msra.mxu0 %v479
    %559 = vmatprep.subr.bf16.mxu0 %v510
    %560 = vmatpush2.bf16.msra.mxu0 %v509
    %561 = vmatprep.subr.bf16.mxu0 %v508
    %562 = vmatpush2.bf16.msra.mxu0 %v507
    %563 = vmatprep.subr.bf16.mxu0 %v506
    %564 = vmatpush2.bf16.msra.mxu0 %v505
    %565 = vmatprep.subr.bf16.mxu0 %v504
    %566 = vmatpush2.bf16.msra.mxu0 %v503
    %567 = vmatprep.subr.bf16.mxu0 %v502
    %568 = vmatpush2.bf16.msra.mxu0 %v501
    %569 = vmatprep.subr.bf16.mxu0 %v500
    %570 = vmatpush2.bf16.msra.mxu0 %v499
    %571 = vmatprep.subr.bf16.mxu0 %v498
    %572 = vmatpush2.bf16.msra.mxu0 %v497
    %573 = vmatprep.subr.bf16.mxu0 %v496
    %574 = vmatpush2.bf16.msra.mxu0 %v495
    %575 = vmatprep.mubr.bf16.mxu0 %v364
    %576 = vmatmul.mubr.bf16.gmra.mxu0 %v363
    %v577 = vpop.f32.mrf.mxu0
    %v578 = vadd.f32 %v378, %v577
    %v579 = vpop.f32.mrf.mxu0
    %v580 = vadd.f32 %v382, %v579
    %v581 = vpop.f32.mrf.mxu0
    %v582 = vadd.f32 %v378, %v581
    %v583 = vpop.f32.mrf.mxu0
    %v584 = vadd.f32 %v382, %v583
    %585 = vdwg.mxu0
    %v586 = vadd.f32 %v49, %v578
    %v587 = vadd.f32 %v50, %v580
    %v588 = vadd.f32 %v51, %v582
    %v589 = vadd.f32 %v52, %v584
    %v590 = vsub.f32 %v53, %v586
    %v591 = vsub.f32 %v54, %v587
    %v592 = vsub.f32 %v55, %v588
    %v593 = vsub.f32 %v56, %v589
    %v594 = vpack.c.bf16 %v592, %v590
    %v595 = vpack.c.bf16 %v593, %v591
    %596 = vmatprep.subr.bf16.mxu0 %v267
    %597 = vmatpush1.bf16.msra.mxu0 %v266
    %598 = vmatprep.subr.bf16.mxu0 %v265
    %599 = vmatpush1.bf16.msra.mxu0 %v264
    %600 = vmatprep.subr.bf16.mxu0 %v263
    %601 = vmatpush1.bf16.msra.mxu0 %v262
    %602 = vmatprep.subr.bf16.mxu0 %v261
    %603 = vmatpush1.bf16.msra.mxu0 %v260
    %604 = vmatprep.subr.bf16.mxu0 %v259
    %605 = vmatpush1.bf16.msra.mxu0 %v258
    %606 = vmatprep.subr.bf16.mxu0 %v257
    %607 = vmatpush1.bf16.msra.mxu0 %v256
    %608 = vmatprep.subr.bf16.mxu0 %v255
    %609 = vmatpush1.bf16.msra.mxu0 %v254
    %610 = vmatprep.subr.bf16.mxu0 %v253
    %611 = vmatpush1.bf16.msra.mxu0 %v252
    %612 = vmatprep.subr.bf16.mxu0 %v283
    %613 = vmatpush2.bf16.msra.mxu0 %v282
    %614 = vmatprep.subr.bf16.mxu0 %v281
    %615 = vmatpush2.bf16.msra.mxu0 %v280
    %616 = vmatprep.subr.bf16.mxu0 %v279
    %617 = vmatpush2.bf16.msra.mxu0 %v278
    %618 = vmatprep.subr.bf16.mxu0 %v277
    %619 = vmatpush2.bf16.msra.mxu0 %v276
    %620 = vmatprep.subr.bf16.mxu0 %v275
    %621 = vmatpush2.bf16.msra.mxu0 %v274
    %622 = vmatprep.subr.bf16.mxu0 %v273
    %623 = vmatpush2.bf16.msra.mxu0 %v272
    %624 = vmatprep.subr.bf16.mxu0 %v271
    %625 = vmatpush2.bf16.msra.mxu0 %v270
    %626 = vmatprep.subr.bf16.mxu0 %v269
    %627 = vmatpush2.bf16.msra.mxu0 %v268
    %628 = vmatprep.mubr.bf16.mxu0 %v595
    %629 = vmatmul.mubr.bf16.gmra.mxu0 %v594
    %v630 = vpop.f32.mrf.mxu0
    %v631 = vadd.f32 %v151, %v630
    %v632 = vpop.f32.mrf.mxu0
    %v633 = vadd.f32 %v155, %v632
    %v634 = vpop.f32.mrf.mxu0
    %v635 = vadd.f32 %v151, %v634
    %v636 = vpop.f32.mrf.mxu0
    %v637 = vadd.f32 %v155, %v636
    %638 = vdwg.mxu0
    %v639 = vmax.f32 %v631, 0.0
    %v640 = vmax.f32 %v633, 0.0
    %v641 = vmax.f32 %v635, 0.0
    %v642 = vmax.f32 %v637, 0.0
    %v643 = vpack.c.bf16 %v641, %v639
    %v644 = vpack.c.bf16 %v642, %v640
    %645 = vmatprep.subr.bf16.mxu0 %v494
    %646 = vmatpush1.bf16.msra.mxu0 %v493
    %647 = vmatprep.subr.bf16.mxu0 %v492
    %648 = vmatpush1.bf16.msra.mxu0 %v491
    %649 = vmatprep.subr.bf16.mxu0 %v490
    %650 = vmatpush1.bf16.msra.mxu0 %v489
    %651 = vmatprep.subr.bf16.mxu0 %v488
    %652 = vmatpush1.bf16.msra.mxu0 %v487
    %653 = vmatprep.subr.bf16.mxu0 %v486
    %654 = vmatpush1.bf16.msra.mxu0 %v485
    %655 = vmatprep.subr.bf16.mxu0 %v484
    %656 = vmatpush1.bf16.msra.mxu0 %v483
    %657 = vmatprep.subr.bf16.mxu0 %v482
    %658 = vmatpush1.bf16.msra.mxu0 %v481
    %659 = vmatprep.subr.bf16.mxu0 %v480
    %660 = vmatpush1.bf16.msra.mxu0 %v479
    %661 = vmatprep.subr.bf16.mxu0 %v510
    %662 = vmatpush2.bf16.msra.mxu0 %v509
    %663 = vmatprep.subr.bf16.mxu0 %v508
    %664 = vmatpush2.bf16.msra.mxu0 %v507
    %665 = vmatprep.subr.bf16.mxu0 %v506
    %666 = vmatpush2.bf16.msra.mxu0 %v505
    %667 = vmatprep.subr.bf16.mxu0 %v504
    %668 = vmatpush2.bf16.msra.mxu0 %v503
    %669 = vmatprep.subr.bf16.mxu0 %v502
    %670 = vmatpush2.bf16.msra.mxu0 %v501
    %671 = vmatprep.subr.bf16.mxu0 %v500
    %672 = vmatpush2.bf16.msra.mxu0 %v499
    %673 = vmatprep.subr.bf16.mxu0 %v498
    %674 = vmatpush2.bf16.msra.mxu0 %v497
    %675 = vmatprep.subr.bf16.mxu0 %v496
    %676 = vmatpush2.bf16.msra.mxu0 %v495
    %677 = vmatprep.mubr.bf16.mxu0 %v644
    %678 = vmatmul.mubr.bf16.gmra.mxu0 %v643
    %v679 = vpop.f32.mrf.mxu0
    %v680 = vadd.f32 %v378, %v679
    %v681 = vpop.f32.mrf.mxu0
    %v682 = vadd.f32 %v382, %v681
    %v683 = vpop.f32.mrf.mxu0
    %v684 = vadd.f32 %v378, %v683
    %v685 = vpop.f32.mrf.mxu0
    %v686 = vadd.f32 %v382, %v685
    %687 = vdwg.mxu0
    %v688 = vadd.f32 %v53, %v680
    %v689 = vadd.f32 %v54, %v682
    %v690 = vadd.f32 %v55, %v684
    %v691 = vadd.f32 %v56, %v686
    %v692 = vadd.f32 %v586, %v587
    %693 = vadd.xlane.f32.xlu0 %v692
    %v694 = vpop.xlane.xlu0 %693
    %v695 = vadd.f32 %v588, %v589
    %696 = vadd.xlane.f32.xlu0 %v695
    %v697 = vpop.xlane.xlu0 %696
    %v698 = vmul.f32 %v694, 0.005952381
    %v699 = vmul.f32 %v697, 0.005952381
    %v700 = vsub.f32 %v586, %v698
    %v701 = vsub.f32 %v587, %v698
    %v702 = vsub.f32 %v588, %v699
    %v703 = vsub.f32 %v589, %v699
    %v704 = vmul.f32 %v700, %v129
    %v705 = vmul.f32 %v701, %v130
    %v706 = vmul.f32 %v702, %v129
    %v707 = vmul.f32 %v703, %v130
    %v708 = vmul.f32 %v704, %v704
    %v709 = vmul.f32 %v705, %v705
    %v710 = vmul.f32 %v706, %v706
    %v711 = vmul.f32 %v707, %v707
    %v712 = vadd.f32 %v708, %v709
    %713 = vadd.xlane.f32.xlu0 %v712
    %v714 = vpop.xlane.xlu0 %713
    %v715 = vadd.f32 %v710, %v711
    %716 = vadd.xlane.f32.xlu0 %v715
    %v717 = vpop.xlane.xlu0 %716
    %v718 = vmul.f32 %v714, 0.005952381
    %v719 = vmul.f32 %v717, 0.005952381
    %v720 = vadd.f32 %v718, 1e-05
    %v721 = vadd.f32 %v719, 1e-05
    %v722 = vrsqrt.pop %v720
    %v723 = vrsqrt.pop %v721
    %v724 = vmul.f32 %v704, %v722
    %v725 = vmul.f32 %v705, %v722
    %v726 = vmul.f32 %v706, %v723
    %v727 = vmul.f32 %v707, %v723
    %v728 = vlaneseq
    %v729 = vshrl.u32 %v728, 7
    %v730 = vsub.s32 2, %v729
    %v731 = vrot.slane %v121, %v730
    %v732 = vlaneseq
    %v733 = vshrl.u32 %v732, 7
    %v734 = vsub.s32 6, %v733
    %v735 = vrot.slane %v121, %v734
    %v738 = vlaneseq
    %v739 = vshrl.u32 %v738, 7
    %v740 = vsub.s32 2, %v739
    %v741 = vrot.slane %v731, %v740
    %v742 = vlaneseq
    %v743 = vshrl.u32 %v742, 7
    %v744 = vsub.s32 2, %v743
    %v745 = vrot.slane %v735, %v744
    %v746 = vmul.f32 %v724, %v741
    %v747 = vmul.f32 %v725, %v745
    %v748 = vmul.f32 %v726, %v741
    %v749 = vmul.f32 %v727, %v745
    %v750 = vlaneseq
    %v751 = vshrl.u32 %v750, 7
    %v752 = vsub.s32 3, %v751
    %v753 = vrot.slane %v121, %v752
    %v754 = vlaneseq
    %v755 = vshrl.u32 %v754, 7
    %v756 = vsub.s32 7, %v755
    %v757 = vrot.slane %v121, %v756
    %v760 = vlaneseq
    %v761 = vshrl.u32 %v760, 7
    %v762 = vsub.s32 3, %v761
    %v763 = vrot.slane %v753, %v762
    %v764 = vlaneseq
    %v765 = vshrl.u32 %v764, 7
    %v766 = vsub.s32 3, %v765
    %v767 = vrot.slane %v757, %v766
    %v768 = vadd.f32 %v746, %v763
    %v769 = vadd.f32 %v747, %v767
    %v770 = vadd.f32 %v748, %v763
    %v771 = vadd.f32 %v749, %v767
    %772 = vst [vmem:[#allocation4] sm:$0xff] %v768
    %773 = vst.msk [vmem:[#allocation4 + $0x8] sm:$0xff] %vm37, %v769
    %774 = vst [vmem:[#allocation4 + $0x10] sm:$0xff] %v770
    %775 = vst.msk [vmem:[#allocation4 + $0x18] sm:$0xff] %vm37, %v771
    %v776 = vadd.f32 %v688, %v689
    %777 = vadd.xlane.f32.xlu0 %v776
    %v778 = vpop.xlane.xlu0 %777
    %v779 = vadd.f32 %v690, %v691
    %780 = vadd.xlane.f32.xlu0 %v779
    %v781 = vpop.xlane.xlu0 %780
    %v782 = vmul.f32 %v778, 0.005952381
    %v783 = vmul.f32 %v781, 0.005952381
    %v784 = vsub.f32 %v688, %v782
    %v785 = vsub.f32 %v689, %v782
    %v786 = vsub.f32 %v690, %v783
    %v787 = vsub.f32 %v691, %v783
    %v788 = vmul.f32 %v784, %v129
    %v789 = vmul.f32 %v785, %v130
    %v790 = vmul.f32 %v786, %v129
    %v791 = vmul.f32 %v787, %v130
    %v792 = vmul.f32 %v788, %v788
    %v793 = vmul.f32 %v789, %v789
    %v794 = vmul.f32 %v790, %v790
    %v795 = vmul.f32 %v791, %v791
    %v796 = vadd.f32 %v792, %v793
    %797 = vadd.xlane.f32.xlu0 %v796
    %v798 = vpop.xlane.xlu0 %797
    %v799 = vadd.f32 %v794, %v795
    %800 = vadd.xlane.f32.xlu0 %v799
    %v801 = vpop.xlane.xlu0 %800
    %v802 = vmul.f32 %v798, 0.005952381
    %v803 = vmul.f32 %v801, 0.005952381
    %v804 = vadd.f32 %v802, 1e-05
    %v805 = vadd.f32 %v803, 1e-05
    %v806 = vrsqrt.pop %v804
    %v807 = vrsqrt.pop %v805
    %v808 = vmul.f32 %v788, %v806
    %v809 = vmul.f32 %v789, %v806
    %v810 = vmul.f32 %v790, %v807
    %v811 = vmul.f32 %v791, %v807
    %v812 = vmul.f32 %v808, %v741
    %v813 = vmul.f32 %v809, %v745
    %v814 = vmul.f32 %v810, %v741
    %v815 = vmul.f32 %v811, %v745
    %v816 = vadd.f32 %v812, %v763
    %v817 = vadd.f32 %v813, %v767
    %v818 = vadd.f32 %v814, %v763
    %v819 = vadd.f32 %v815, %v767
    %820 = vst [vmem:[#allocation6] sm:$0xff] %v816
    %821 = vst.msk [vmem:[#allocation6 + $0x8] sm:$0xff] %vm37, %v817
    %822 = vst [vmem:[#allocation6 + $0x10] sm:$0xff] %v818
    %823 = vst.msk [vmem:[#allocation6 + $0x18] sm:$0xff] %vm37, %v819
    // Predicated region
    $region22: #{bindformer_forward.1} parent=1 // pred_check
      _
    $region23: #{bindformer_forward.1} parent=1 // pred_check_branch
      %825 = sbr.rel (0) target = $region25
    $region24: #{bindformer_forward.1} parent=1 // pred_region
      %s827 = ssub.s32 512, 512
      %828 = vsyncadd [#allocation5], %s827
      %s829 = sshll.u32 [#allocation4], 4
      %s830 = int_to_ptr.vmem [resolvable:$true] %s829
      %835 = dma.vmem_to_hbm [thread:$0]  %s830, 512, %s5, [#allocation5], 256, 256, 16
    $region25: #{bindformer_forward.1} parent=1 // pred_fallthru
      _
    // Predicated region
    $region26: #{bindformer_forward.1} parent=1 // pred_check
      _
    $region27: #{bindformer_forward.1} parent=1 // pred_check_branch
      %837 = sbr.rel (0) target = $region29
    $region28: #{bindformer_forward.1} parent=1 // pred_region
      %s839 = ssub.s32 512, 512
      %840 = vsyncadd [#allocation7], %s839
      %s841 = sshll.u32 [#allocation6], 4
      %s842 = int_to_ptr.vmem [resolvable:$true] %s841
      %847 = dma.vmem_to_hbm [thread:$0]  %s842, 512, %s6, [#allocation7], 256, 256, 16
    $region29: #{bindformer_forward.1} parent=1 // pred_fallthru
      _
    // Predicated region
    $region30: #{bindformer_forward.1} parent=1 // pred_check
      _
    $region31: #{bindformer_forward.1} parent=1 // pred_check_branch
      %849 = sbr.rel (0) target = $region33
    $region32: #{bindformer_forward.1} parent=1 // pred_region
      %850 = dma.done [#allocation5], 512
    $region33: #{bindformer_forward.1} parent=1 // pred_fallthru
      _
    // Predicated region
    $region34: #{bindformer_forward.1} parent=1 // pred_check
      _
    $region35: #{bindformer_forward.1} parent=1 // pred_check_branch
      %852 = sbr.rel (0) target = $region37
    $region36: #{bindformer_forward.1} parent=1 // pred_region
      %853 = dma.done [#allocation7], 512
    $region37: #{bindformer_forward.1} parent=1 // pred_fallthru
      _
    %854 = vsyncpa [#allocation5], 1
    %855 = vsyncpa [#allocation7], 1

</llo_original>
